<compile_context>
chip_gen: v5e
topology: v5e:2x2
jax: 0.10.0
libtpu: 0.0.40
codegen_flags: <defaults>
</compile_context>

<pallas_src>
import functools

import jax
import jax.numpy as jnp
from jax.experimental import pallas as pl
from jax.experimental.pallas import tpu as pltpu


# ----------------------------------------------------------------------------
# Fused Pallas kernel (channel-major: channels on sublanes, flat raster on lanes)
# ----------------------------------------------------------------------------
def _fused_decoder_kernel(xup_ref, pooled_ref, wd4_ref, w1_ref, w2_ref,
                          bd_ref, c1b_ref, g1_ref, b1_ref,
                          c2b_ref, g2_ref, b2_ref,
                          out_ref,
                          cat_pad, h1_pad,
                          *, Hi, Wi, n1, n2, eps, cdtype):
    f32 = jnp.float32
    C2, M = out_ref.shape
    Cin1p, Mp = cat_pad.shape
    C1p = h1_pad.shape[0]
    Cd = bd_ref.shape[0]
    Cp = pooled_ref.shape[0]
    C1 = g1_ref.shape[0]
    taps = [kh * Wi + kw for kh in range(3) for kw in range(3)]

    # --- masks from an in-kernel lane iota (no per-row mask tensor from HBM) ----------
    lane = jax.lax.broadcasted_iota(jnp.int32, (1, M), 1)
    if (Wi & (Wi - 1)) == 0 and (Hi & (Hi - 1)) == 0:
        # power-of-two fast path: shifts/ands only (always true for the demo shapes)
        q = lane & (Wi - 1)
        p = (lane >> (Wi.bit_length() - 1)) & (Hi - 1)
    else:
        # TODO(synk): vector integer div/mod fallback; slower on some Mosaic versions.
        q = lane % Wi
        p = (lane // Wi) % Hi
    p_even = (p & 1) == 0
    q_even = (q & 1) == 0
    valid1 = ((p < Hi - 2) & (q < Wi - 2)).astype(f32)   # conv1 VALID output lanes
    valid2 = ((p < Hi - 4) & (q < Wi - 4)).astype(f32)   # conv2 VALID output lanes

    # --- ConvTranspose2d(k=2, s=2): ONE stacked 4-tap dot + parity select --------------
    y4 = jnp.dot(wd4_ref[...], xup_ref[...], preferred_element_type=f32)   # (4*Cd, M)
    y = jnp.where(p_even,
                  jnp.where(q_even, y4[0 * Cd:1 * Cd, :], y4[1 * Cd:2 * Cd, :]),
                  jnp.where(q_even, y4[2 * Cd:3 * Cd, :], y4[3 * Cd:4 * Cd, :]))
    y = y + bd_ref[...]                                                     # deconv bias

    # --- stage concat([deconv, pooled]) into a lane-padded f32 scratch ------------------
    pieces = [y, pooled_ref[...].astype(f32)]
    if Cin1p > Cd + Cp:
        pieces.append(jnp.zeros((Cin1p - Cd - Cp, M), f32))
    cat_pad[:, 0:M] = jnp.concatenate(pieces, axis=0)
    cat_pad[:, M:Mp] = jnp.zeros((Cin1p, Mp - M), f32)       # keep OOW reads finite

    # --- Conv1 3x3 VALID: merged in-VMEM im2col (9 shifted lane windows) + ONE dot ------
    im1 = jnp.concatenate([cat_pad[:, pl.ds(off, M)] for off in taps], axis=0)
    acc1 = jnp.dot(w1_ref[...], im1.astype(cdtype), preferred_element_type=f32)
    acc1 = acc1 + c1b_ref[...]                                             # conv1 bias

    # --- BatchNorm1 (training-mode, biased var) over valid lanes only -------------------
    mu1 = jnp.sum(acc1 * valid1, axis=1, keepdims=True) * (1.0 / n1)
    d1 = acc1 - mu1
    var1 = jnp.sum(d1 * d1 * valid1, axis=1, keepdims=True) * (1.0 / n1)
    h1 = d1 * jax.lax.rsqrt(var1 + eps) * g1_ref[...] + b1_ref[...]

    hp = [h1] if C1p == C1 else [h1, jnp.zeros((C1p - C1, M), f32)]
    h1_pad[:, 0:M] = jnp.concatenate(hp, axis=0)
    h1_pad[:, M:Mp] = jnp.zeros((C1p, Mp - M), f32)

    # --- Conv2 3x3 VALID: merged im2col + ONE dot ---------------------------------------
    im2 = jnp.concatenate([h1_pad[:, pl.ds(off, M)] for off in taps], axis=0)
    acc2 = jnp.dot(w2_ref[...], im2.astype(cdtype), preferred_element_type=f32)
    acc2 = acc2 + c2b_ref[...]                                             # conv2 bias

    # --- BatchNorm2 + ReLU; lane-dense output store (garbage lanes cropped by wrapper) --
    mu2 = jnp.sum(acc2 * valid2, axis=1, keepdims=True) * (1.0 / n2)
    d2 = acc2 - mu2
    var2 = jnp.sum(d2 * d2 * valid2, axis=1, keepdims=True) * (1.0 / n2)
    h2 = d2 * jax.lax.rsqrt(var2 + eps) * g2_ref[...] + b2_ref[...]
    out_ref[...] = jnp.maximum(h2, 0.0)


# ----------------------------------------------------------------------------
# Wrapper: layout glue only (tiny trace-time transposes / weight re-layouts)
# ----------------------------------------------------------------------------
def decoder_component_forward(inp_nchw, pooled_nchw, params, *, eps=1e-5,
                              compute_dtype=jnp.bfloat16):
    B, Ci, H, W = inp_nchw.shape
    Cp = pooled_nchw.shape[1]
    Cd = params["deconv_w"].shape[1]
    C1 = params["conv1_w"].shape[0]
    C2 = params["conv2_w"].shape[0]
    Hi, Wi = 2 * H, 2 * W
    assert Hi > 4 and Wi > 4, "spatial input too small for the two VALID 3x3 convs"
    M = B * Hi * Wi
    Cin1 = Cd + Cp
    Cin1p = -(-Cin1 // 8) * 8           # pad channel rows to sublane-aligned multiples
    C1p = -(-C1 // 8) * 8
    pad = -(-(2 * Wi + 2) // 128) * 128  # lane padding for the largest window shift
    Mp = M + pad
    cdtype = compute_dtype

    # channel-major, lane-dense layouts: channels on sublanes, flat raster on lanes.
    # 2x nearest-upsampled input -> deconv becomes a parity select (see header TODO).
    xc = jnp.transpose(inp_nchw, (1, 0, 2, 3))                               # (Ci,B,H,W)
    xup = jnp.broadcast_to(xc[:, :, :, None, :, None], (Ci, B, H, 2, W, 2))
    xup2d = xup.reshape(Ci, M).astype(cdtype)
    pooled2d = jnp.transpose(pooled_nchw, (1, 0, 2, 3)).reshape(Cp, M).astype(cdtype)

    # weight re-layouts (tap-major), zero-padded on input channels to sublane multiples
    wd4 = jnp.transpose(params["deconv_w"], (2, 3, 1, 0)).reshape(4 * Cd, Ci).astype(cdtype)
    w1_full = jnp.pad(params["conv1_w"], ((0, 0), (0, Cin1p - Cin1), (0, 0), (0, 0)))
    w1 = jnp.transpose(w1_full, (0, 2, 3, 1)).reshape(C1, 9 * Cin1p).astype(cdtype)
    w2_full = jnp.pad(params["conv2_w"], ((0, 0), (0, C1p - C1), (0, 0), (0, 0)))
    w2 = jnp.transpose(w2_full, (0, 2, 3, 1)).reshape(C2, 9 * C1p).astype(cdtype)

    col = lambda v: v.reshape(-1, 1).astype(jnp.float32)
    bd, c1b, c2b = col(params["deconv_b"]), col(params["conv1_b"]), col(params["conv2_b"])
    g1, b1 = col(params["bn1_g"]), col(params["bn1_b"])
    g2, b2 = col(params["bn2_g"]), col(params["bn2_b"])

    n1 = float(B * (Hi - 2) * (Wi - 2))
    n2 = float(B * (Hi - 4) * (Wi - 4))
    kernel = functools.partial(_fused_decoder_kernel, Hi=Hi, Wi=Wi, n1=n1, n2=n2,
                               eps=eps, cdtype=cdtype)

    def full(shape):
        return pl.BlockSpec(shape, lambda i: (0,) * len(shape))

    # grid=(1,): nothing to pipeline, so default double-buffering of inputs is a no-op
    # cost here; see header TODO for the M-tiled / two-pass-BN variant used when scaling.
    out2d = pl.pallas_call(
        kernel,
        out_shape=jax.ShapeDtypeStruct((C2, M), jnp.float32),
        grid=(1,),
        in_specs=[full(xup2d.shape), full(pooled2d.shape),
                  full(wd4.shape), full(w1.shape), full(w2.shape),
                  full(bd.shape), full(c1b.shape), full(g1.shape), full(b1.shape),
                  full(c2b.shape), full(g2.shape), full(b2.shape)],
        out_specs=full((C2, M)),
        scratch_shapes=[pltpu.VMEM((Cin1p, Mp), jnp.float32),   # padded concat operand
                        pltpu.VMEM((C1p, Mp), jnp.float32)],    # padded h1
        compiler_params=pltpu.CompilerParams(
            dimension_semantics=("arbitrary",),
            vmem_limit_bytes=32 * 1024 * 1024),
    )(xup2d, pooled2d, wd4, w1, w2, bd, c1b, g1, b1, c2b, g2, b2)

    out = jnp.transpose(out2d.reshape(C2, B, Hi, Wi), (1, 0, 2, 3))
    return out[:, :, :Hi - 4, :Wi - 4]                          # crop the VALID window


# ----------------------------------------------------------------------------
# Pure-JAX reference (for correctness check)
# ----------------------------------------------------------------------------
def _bn_train(x_nchw, gamma, beta, eps=1e-5):
    mu = jnp.mean(x_nchw, axis=(0, 2, 3), keepdims=True)
    var = jnp.mean((x_nchw - mu) ** 2, axis=(0, 2, 3), keepdims=True)
    return (x_nchw - mu) * jax.lax.rsqrt(var + eps) * gamma[None, :, None, None] \
        + beta[None, :, None, None]


def reference_forward(inp, pooled, prm, eps=1e-5):
    B, Cin, H, W = inp.shape
    Cout = prm["deconv_w"].shape[1]
    t = jnp.einsum("bchw,cokl->bohkwl", inp, prm["deconv_w"])
    ret = t.reshape(B, Cout, 2 * H, 2 * W) + prm["deconv_b"][None, :, None, None]
    ret = jnp.concatenate([ret, pooled], axis=1)
    dn = ("NCHW", "OIHW", "NCHW")
    ret = jax.lax.conv_general_dilated(ret, prm["conv1_w"], (1, 1), "VALID",
                                       dimension_numbers=dn) + prm["conv1_b"][None, :, None, None]
    ret = _bn_train(ret, prm["bn1_g"], prm["bn1_b"], eps)
    ret = jax.lax.conv_general_dilated(ret, prm["conv2_w"], (1, 1), "VALID",
                                       dimension_numbers=dn) + prm["conv2_b"][None, :, None, None]
    ret = _bn_train(ret, prm["bn2_g"], prm["bn2_b"], eps)
    return jnp.maximum(ret, 0.0)


# ----------------------------------------------------------------------------
if __name__ == "__main__":
    in_size, out_size = 8, 4          # pooled channels = in_size - out_size
    B, H, W = 2, 8, 8

    key = jax.random.PRNGKey(0)
    ks = jax.random.split(key, 12)
    params = {
        "deconv_w": 0.1 * jax.random.normal(ks[0], (in_size, out_size, 2, 2), jnp.float32),
        "deconv_b": 0.1 * jax.random.normal(ks[1], (out_size,), jnp.float32),
        "conv1_w": 0.1 * jax.random.normal(ks[2], (out_size, in_size, 3, 3), jnp.float32),
        "conv1_b": 0.1 * jax.random.normal(ks[3], (out_size,), jnp.float32),
        "bn1_g": 1.0 + 0.1 * jax.random.normal(ks[4], (out_size,), jnp.float32),
        "bn1_b": 0.1 * jax.random.normal(ks[5], (out_size,), jnp.float32),
        "conv2_w": 0.1 * jax.random.normal(ks[6], (out_size, out_size, 3, 3), jnp.float32),
        "conv2_b": 0.1 * jax.random.normal(ks[7], (out_size,), jnp.float32),
        "bn2_g": 1.0 + 0.1 * jax.random.normal(ks[8], (out_size,), jnp.float32),
        "bn2_b": 0.1 * jax.random.normal(ks[9], (out_size,), jnp.float32),
    }

    inp = jax.random.normal(ks[10], (B, in_size, H, W), jnp.float32)               # NCHW
    pooled = jax.random.normal(ks[11], (B, in_size - out_size, 2 * H, 2 * W), jnp.float32)

    ref = jax.block_until_ready(reference_forward(inp, pooled, params))

    # 1) exact-precision configuration: the correctness gate
    fwd_f32 = jax.jit(functools.partial(decoder_component_forward, compute_dtype=jnp.float32))
    out_f32 = jax.block_until_ready(fwd_f32(inp, pooled, params))
    assert out_f32.shape == (B, out_size, 2 * H - 4, 2 * W - 4), out_f32.shape
    err32 = float(jnp.max(jnp.abs(out_f32 - ref)))
    assert err32 < 2e-3, f"f32 path mismatch vs reference: max abs err = {err32}"

    # 2) bf16 MXU-operand configuration (performance-review default); looser tolerance
    fwd_bf16 = jax.jit(functools.partial(decoder_component_forward, compute_dtype=jnp.bfloat16))
    out_bf16 = jax.block_until_ready(fwd_bf16(inp, pooled, params))
    errbf = float(jnp.max(jnp.abs(out_bf16 - ref)))
    assert errbf < 1e-1, f"bf16 path mismatch vs reference: max abs err = {errbf}"

    print("KERNEL_OK")
</pallas_src>

<mosaic_0001>
module attributes {stable_mosaic.version = 11 : i64} {
  func.func @_fused_decoder_kernel(%arg0: i32, %arg1: memref<8x512xf32, #tpu.memory_space<vmem>>, %arg2: memref<4x512xf32, #tpu.memory_space<vmem>>, %arg3: memref<16x8xf32, #tpu.memory_space<vmem>>, %arg4: memref<4x72xf32, #tpu.memory_space<vmem>>, %arg5: memref<4x72xf32, #tpu.memory_space<vmem>>, %arg6: memref<4x1xf32, #tpu.memory_space<vmem>>, %arg7: memref<4x1xf32, #tpu.memory_space<vmem>>, %arg8: memref<4x1xf32, #tpu.memory_space<vmem>>, %arg9: memref<4x1xf32, #tpu.memory_space<vmem>>, %arg10: memref<4x1xf32, #tpu.memory_space<vmem>>, %arg11: memref<4x1xf32, #tpu.memory_space<vmem>>, %arg12: memref<4x1xf32, #tpu.memory_space<vmem>>, %arg13: memref<4x512xf32, #tpu.memory_space<vmem>>, %arg14: memref<8x640xf32, #tpu.memory_space<vmem>>, %arg15: memref<8x640xf32, #tpu.memory_space<vmem>>) attributes {dimension_semantics = [#tpu.dimension_semantics<arbitrary>], iteration_bounds = array<i64: 1>, scalar_prefetch = 0 : i64, scratch_operands = 2 : i64, tpu.core_type = #tpu.core_type<tc>, window_params = [{pipeline_mode = #tpu.pipeline_mode<synchronous>, transform_indices = @transform_0, window_bounds = array<i64: 8, 512>}, {pipeline_mode = #tpu.pipeline_mode<synchronous>, transform_indices = @transform_1, window_bounds = array<i64: 4, 512>}, {pipeline_mode = #tpu.pipeline_mode<synchronous>, transform_indices = @transform_2, window_bounds = array<i64: 16, 8>}, {pipeline_mode = #tpu.pipeline_mode<synchronous>, transform_indices = @transform_3, window_bounds = array<i64: 4, 72>}, {pipeline_mode = #tpu.pipeline_mode<synchronous>, transform_indices = @transform_4, window_bounds = array<i64: 4, 72>}, {pipeline_mode = #tpu.pipeline_mode<synchronous>, transform_indices = @transform_5, window_bounds = array<i64: 4, 1>}, {pipeline_mode = #tpu.pipeline_mode<synchronous>, transform_indices = @transform_6, window_bounds = array<i64: 4, 1>}, {pipeline_mode = #tpu.pipeline_mode<synchronous>, transform_indices = @transform_7, window_bounds = array<i64: 4, 1>}, {pipeline_mode = #tpu.pipeline_mode<synchronous>, transform_indices = @transform_8, window_bounds = array<i64: 4, 1>}, {pipeline_mode = #tpu.pipeline_mode<synchronous>, transform_indices = @transform_9, window_bounds = array<i64: 4, 1>}, {pipeline_mode = #tpu.pipeline_mode<synchronous>, transform_indices = @transform_10, window_bounds = array<i64: 4, 1>}, {pipeline_mode = #tpu.pipeline_mode<synchronous>, transform_indices = @transform_11, window_bounds = array<i64: 4, 1>}, {pipeline_mode = #tpu.pipeline_mode<synchronous>, transform_indices = @transform_12, window_bounds = array<i64: 4, 512>}]} {
    %0 = tpu.iota {dimensions = array<i32: 1>} : vector<1x512xi32>
    %c15_i32 = arith.constant 15 : i32
    %1 = vector.broadcast %c15_i32 : i32 to vector<1x512xi32>
    %2 = arith.andi %0, %1 : vector<1x512xi32>
    %c4_i32 = arith.constant 4 : i32
    %3 = vector.broadcast %c4_i32 : i32 to vector<1x512xi32>
    %4 = arith.shrsi %0, %3 : vector<1x512xi32>
    %c15_i32_0 = arith.constant 15 : i32
    %5 = vector.broadcast %c15_i32_0 : i32 to vector<1x512xi32>
    %6 = arith.andi %4, %5 : vector<1x512xi32>
    %c1_i32 = arith.constant 1 : i32
    %7 = vector.broadcast %c1_i32 : i32 to vector<1x512xi32>
    %8 = arith.andi %6, %7 : vector<1x512xi32>
    %c0_i32 = arith.constant 0 : i32
    %9 = vector.broadcast %c0_i32 : i32 to vector<1x512xi32>
    %10 = arith.cmpi eq, %8, %9 : vector<1x512xi32>
    %c1_i32_1 = arith.constant 1 : i32
    %11 = vector.broadcast %c1_i32_1 : i32 to vector<1x512xi32>
    %12 = arith.andi %2, %11 : vector<1x512xi32>
    %c0_i32_2 = arith.constant 0 : i32
    %13 = vector.broadcast %c0_i32_2 : i32 to vector<1x512xi32>
    %14 = arith.cmpi eq, %12, %13 : vector<1x512xi32>
    %c14_i32 = arith.constant 14 : i32
    %15 = vector.broadcast %c14_i32 : i32 to vector<1x512xi32>
    %16 = arith.cmpi slt, %6, %15 : vector<1x512xi32>
    %c14_i32_3 = arith.constant 14 : i32
    %17 = vector.broadcast %c14_i32_3 : i32 to vector<1x512xi32>
    %18 = arith.cmpi slt, %2, %17 : vector<1x512xi32>
    %19 = arith.andi %16, %18 : vector<1x512xi1>
    %20 = arith.extui %19 : vector<1x512xi1> to vector<1x512xi32>
    %21 = arith.sitofp %20 : vector<1x512xi32> to vector<1x512xf32>
    %c12_i32 = arith.constant 12 : i32
    %22 = vector.broadcast %c12_i32 : i32 to vector<1x512xi32>
    %23 = arith.cmpi slt, %6, %22 : vector<1x512xi32>
    %c12_i32_4 = arith.constant 12 : i32
    %24 = vector.broadcast %c12_i32_4 : i32 to vector<1x512xi32>
    %25 = arith.cmpi slt, %2, %24 : vector<1x512xi32>
    %26 = arith.andi %23, %25 : vector<1x512xi1>
    %27 = arith.extui %26 : vector<1x512xi1> to vector<1x512xi32>
    %28 = arith.sitofp %27 : vector<1x512xi32> to vector<1x512xf32>
    %c0 = arith.constant 0 : index
    %c0_5 = arith.constant 0 : index
    %29 = vector.load %arg3[%c0, %c0_5] : memref<16x8xf32, #tpu.memory_space<vmem>>, vector<16x8xf32>
    %c0_6 = arith.constant 0 : index
    %c0_7 = arith.constant 0 : index
    %30 = vector.load %arg1[%c0_6, %c0_7] : memref<8x512xf32, #tpu.memory_space<vmem>>, vector<8x512xf32>
    %cst = arith.constant dense<0.000000e+00> : vector<16x512xf32>
    %31 = tpu.matmul %29, %30, %cst {dimension_numbers = #tpu.dot_dimension_numbers<[1], [0], [0], [1], [0, 0, 1, 1], [], []>} : vector<16x8xf32>, vector<8x512xf32>, vector<16x512xf32> -> vector<16x512xf32>
    %32 = vector.extract_strided_slice %31 {offsets = [0, 0], sizes = [4, 512], strides = [1, 1]} : vector<16x512xf32> to vector<4x512xf32>
    %33 = vector.extract_strided_slice %31 {offsets = [4, 0], sizes = [4, 512], strides = [1, 1]} : vector<16x512xf32> to vector<4x512xf32>
    %34 = vector.shape_cast %14 : vector<1x512xi1> to vector<1x512xi1>
    %35 = vector.broadcast %34 : vector<1x512xi1> to vector<4x512xi1>
    %36 = arith.select %35, %32, %33 : vector<4x512xi1>, vector<4x512xf32>
    %37 = vector.extract_strided_slice %31 {offsets = [8, 0], sizes = [4, 512], strides = [1, 1]} : vector<16x512xf32> to vector<4x512xf32>
    %38 = vector.extract_strided_slice %31 {offsets = [12, 0], sizes = [4, 512], strides = [1, 1]} : vector<16x512xf32> to vector<4x512xf32>
    %39 = vector.shape_cast %14 : vector<1x512xi1> to vector<1x512xi1>
    %40 = vector.broadcast %39 : vector<1x512xi1> to vector<4x512xi1>
    %41 = arith.select %40, %37, %38 : vector<4x512xi1>, vector<4x512xf32>
    %42 = vector.shape_cast %10 : vector<1x512xi1> to vector<1x512xi1>
    %43 = vector.broadcast %42 : vector<1x512xi1> to vector<4x512xi1>
    %44 = arith.select %43, %36, %41 : vector<4x512xi1>, vector<4x512xf32>
    %c0_8 = arith.constant 0 : index
    %c0_9 = arith.constant 0 : index
    %45 = vector.load %arg6[%c0_8, %c0_9] : memref<4x1xf32, #tpu.memory_space<vmem>>, vector<4x1xf32>
    %46 = vector.broadcast %45 : vector<4x1xf32> to vector<4x512xf32>
    %47 = arith.addf %44, %46 : vector<4x512xf32>
    %c0_10 = arith.constant 0 : index
    %c0_11 = arith.constant 0 : index
    %48 = vector.load %arg2[%c0_10, %c0_11] : memref<4x512xf32, #tpu.memory_space<vmem>>, vector<4x512xf32>
    %49 = tpu.concatenate %47, %48 in 0 : vector<4x512xf32>, vector<4x512xf32> -> vector<8x512xf32>
    %c0_12 = arith.constant 0 : index
    %c0_13 = arith.constant 0 : index
    %50 = vector.load %arg14[%c0_12, %c0_13] : memref<8x640xf32, #tpu.memory_space<vmem>>, vector<8x512xf32>
    tpu.vector_store %arg14[%c0_12, %c0_13], %49 {strides = array<i32>} : memref<8x640xf32, #tpu.memory_space<vmem>>, vector<8x512xf32>,
    %cst_14 = arith.constant 0.000000e+00 : f32
    %51 = vector.broadcast %cst_14 : f32 to vector<8x128xf32>
    %c0_15 = arith.constant 0 : index
    %c512 = arith.constant 512 : index
    %52 = vector.load %arg14[%c0_15, %c512] : memref<8x640xf32, #tpu.memory_space<vmem>>, vector<8x128xf32>
    tpu.vector_store %arg14[%c0_15, %c512], %51 {strides = array<i32>} : memref<8x640xf32, #tpu.memory_space<vmem>>, vector<8x128xf32>,
    %c0_16 = arith.constant 0 : index
    %c0_17 = arith.constant 0 : index
    %53 = vector.load %arg14[%c0_16, %c0_17] : memref<8x640xf32, #tpu.memory_space<vmem>>, vector<8x512xf32>
    %c0_18 = arith.constant 0 : index
    %c1 = arith.constant 1 : index
    %54 = vector.load %arg14[%c0_18, %c1] : memref<8x640xf32, #tpu.memory_space<vmem>>, vector<8x512xf32>
    %c0_19 = arith.constant 0 : index
    %c2 = arith.constant 2 : index
    %55 = vector.load %arg14[%c0_19, %c2] : memref<8x640xf32, #tpu.memory_space<vmem>>, vector<8x512xf32>
    %c0_20 = arith.constant 0 : index
    %c16 = arith.constant 16 : index
    %56 = vector.load %arg14[%c0_20, %c16] : memref<8x640xf32, #tpu.memory_space<vmem>>, vector<8x512xf32>
    %c0_21 = arith.constant 0 : index
    %c17 = arith.constant 17 : index
    %57 = vector.load %arg14[%c0_21, %c17] : memref<8x640xf32, #tpu.memory_space<vmem>>, vector<8x512xf32>
    %c0_22 = arith.constant 0 : index
    %c18 = arith.constant 18 : index
    %58 = vector.load %arg14[%c0_22, %c18] : memref<8x640xf32, #tpu.memory_space<vmem>>, vector<8x512xf32>
    %c0_23 = arith.constant 0 : index
    %c32 = arith.constant 32 : index
    %59 = vector.load %arg14[%c0_23, %c32] : memref<8x640xf32, #tpu.memory_space<vmem>>, vector<8x512xf32>
    %c0_24 = arith.constant 0 : index
    %c33 = arith.constant 33 : index
    %60 = vector.load %arg14[%c0_24, %c33] : memref<8x640xf32, #tpu.memory_space<vmem>>, vector<8x512xf32>
    %c0_25 = arith.constant 0 : index
    %c34 = arith.constant 34 : index
    %61 = vector.load %arg14[%c0_25, %c34] : memref<8x640xf32, #tpu.memory_space<vmem>>, vector<8x512xf32>
    %62 = tpu.concatenate %53, %54, %55, %56, %57, %58, %59, %60, %61 in 0 : vector<8x512xf32>, vector<8x512xf32>, vector<8x512xf32>, vector<8x512xf32>, vector<8x512xf32>, vector<8x512xf32>, vector<8x512xf32>, vector<8x512xf32>, vector<8x512xf32> -> vector<72x512xf32>
    %c0_26 = arith.constant 0 : index
    %c0_27 = arith.constant 0 : index
    %63 = vector.load %arg4[%c0_26, %c0_27] : memref<4x72xf32, #tpu.memory_space<vmem>>, vector<4x72xf32>
    %cst_28 = arith.constant dense<0.000000e+00> : vector<4x512xf32>
    %64 = tpu.matmul %63, %62, %cst_28 {dimension_numbers = #tpu.dot_dimension_numbers<[1], [0], [0], [1], [0, 0, 1, 1], [], []>} : vector<4x72xf32>, vector<72x512xf32>, vector<4x512xf32> -> vector<4x512xf32>
    %c0_29 = arith.constant 0 : index
    %c0_30 = arith.constant 0 : index
    %65 = vector.load %arg7[%c0_29, %c0_30] : memref<4x1xf32, #tpu.memory_space<vmem>>, vector<4x1xf32>
    %66 = vector.broadcast %65 : vector<4x1xf32> to vector<4x512xf32>
    %67 = arith.addf %64, %66 : vector<4x512xf32>
    %68 = vector.broadcast %21 : vector<1x512xf32> to vector<4x512xf32>
    %69 = arith.mulf %67, %68 : vector<4x512xf32>
    %cst_31 = arith.constant dense<0.000000e+00> : vector<4xf32>
    %70 = vector.multi_reduction <add>, %69, %cst_31 [1] : vector<4x512xf32> to vector<4xf32>
    %71 = vector.shape_cast %70 : vector<4xf32> to vector<4x1xf32>
    %cst_32 = arith.constant 0.00255102036 : f32
    %72 = vector.broadcast %cst_32 : f32 to vector<4x1xf32>
    %73 = arith.mulf %71, %72 : vector<4x1xf32>
    %74 = vector.broadcast %73 : vector<4x1xf32> to vector<4x512xf32>
    %75 = arith.subf %67, %74 : vector<4x512xf32>
    %76 = arith.mulf %75, %75 : vector<4x512xf32>
    %77 = vector.broadcast %21 : vector<1x512xf32> to vector<4x512xf32>
    %78 = arith.mulf %76, %77 : vector<4x512xf32>
    %cst_33 = arith.constant dense<0.000000e+00> : vector<4xf32>
    %79 = vector.multi_reduction <add>, %78, %cst_33 [1] : vector<4x512xf32> to vector<4xf32>
    %80 = vector.shape_cast %79 : vector<4xf32> to vector<4x1xf32>
    %cst_34 = arith.constant 0.00255102036 : f32
    %81 = vector.broadcast %cst_34 : f32 to vector<4x1xf32>
    %82 = arith.mulf %80, %81 : vector<4x1xf32>
    %cst_35 = arith.constant 9.99999974E-6 : f32
    %83 = vector.broadcast %cst_35 : f32 to vector<4x1xf32>
    %84 = arith.addf %82, %83 : vector<4x1xf32>
    %85 = math.rsqrt %84 : vector<4x1xf32>
    %86 = vector.broadcast %85 : vector<4x1xf32> to vector<4x512xf32>
    %87 = arith.mulf %75, %86 : vector<4x512xf32>
    %c0_36 = arith.constant 0 : index
    %c0_37 = arith.constant 0 : index
    %88 = vector.load %arg8[%c0_36, %c0_37] : memref<4x1xf32, #tpu.memory_space<vmem>>, vector<4x1xf32>
    %89 = vector.broadcast %88 : vector<4x1xf32> to vector<4x512xf32>
    %90 = arith.mulf %87, %89 : vector<4x512xf32>
    %c0_38 = arith.constant 0 : index
    %c0_39 = arith.constant 0 : index
    %91 = vector.load %arg9[%c0_38, %c0_39] : memref<4x1xf32, #tpu.memory_space<vmem>>, vector<4x1xf32>
    %92 = vector.broadcast %91 : vector<4x1xf32> to vector<4x512xf32>
    %93 = arith.addf %90, %92 : vector<4x512xf32>
    %cst_40 = arith.constant 0.000000e+00 : f32
    %94 = vector.broadcast %cst_40 : f32 to vector<4x512xf32>
    %95 = tpu.concatenate %93, %94 in 0 : vector<4x512xf32>, vector<4x512xf32> -> vector<8x512xf32>
    %c0_41 = arith.constant 0 : index
    %c0_42 = arith.constant 0 : index
    %96 = vector.load %arg15[%c0_41, %c0_42] : memref<8x640xf32, #tpu.memory_space<vmem>>, vector<8x512xf32>
    tpu.vector_store %arg15[%c0_41, %c0_42], %95 {strides = array<i32>} : memref<8x640xf32, #tpu.memory_space<vmem>>, vector<8x512xf32>,
    %cst_43 = arith.constant 0.000000e+00 : f32
    %97 = vector.broadcast %cst_43 : f32 to vector<8x128xf32>
    %c0_44 = arith.constant 0 : index
    %c512_45 = arith.constant 512 : index
    %98 = vector.load %arg15[%c0_44, %c512_45] : memref<8x640xf32, #tpu.memory_space<vmem>>, vector<8x128xf32>
    tpu.vector_store %arg15[%c0_44, %c512_45], %97 {strides = array<i32>} : memref<8x640xf32, #tpu.memory_space<vmem>>, vector<8x128xf32>,
    %c0_46 = arith.constant 0 : index
    %c0_47 = arith.constant 0 : index
    %99 = vector.load %arg15[%c0_46, %c0_47] : memref<8x640xf32, #tpu.memory_space<vmem>>, vector<8x512xf32>
    %c0_48 = arith.constant 0 : index
    %c1_49 = arith.constant 1 : index
    %100 = vector.load %arg15[%c0_48, %c1_49] : memref<8x640xf32, #tpu.memory_space<vmem>>, vector<8x512xf32>
    %c0_50 = arith.constant 0 : index
    %c2_51 = arith.constant 2 : index
    %101 = vector.load %arg15[%c0_50, %c2_51] : memref<8x640xf32, #tpu.memory_space<vmem>>, vector<8x512xf32>
    %c0_52 = arith.constant 0 : index
    %c16_53 = arith.constant 16 : index
    %102 = vector.load %arg15[%c0_52, %c16_53] : memref<8x640xf32, #tpu.memory_space<vmem>>, vector<8x512xf32>
    %c0_54 = arith.constant 0 : index
    %c17_55 = arith.constant 17 : index
    %103 = vector.load %arg15[%c0_54, %c17_55] : memref<8x640xf32, #tpu.memory_space<vmem>>, vector<8x512xf32>
    %c0_56 = arith.constant 0 : index
    %c18_57 = arith.constant 18 : index
    %104 = vector.load %arg15[%c0_56, %c18_57] : memref<8x640xf32, #tpu.memory_space<vmem>>, vector<8x512xf32>
    %c0_58 = arith.constant 0 : index
    %c32_59 = arith.constant 32 : index
    %105 = vector.load %arg15[%c0_58, %c32_59] : memref<8x640xf32, #tpu.memory_space<vmem>>, vector<8x512xf32>
    %c0_60 = arith.constant 0 : index
    %c33_61 = arith.constant 33 : index
    %106 = vector.load %arg15[%c0_60, %c33_61] : memref<8x640xf32, #tpu.memory_space<vmem>>, vector<8x512xf32>
    %c0_62 = arith.constant 0 : index
    %c34_63 = arith.constant 34 : index
    %107 = vector.load %arg15[%c0_62, %c34_63] : memref<8x640xf32, #tpu.memory_space<vmem>>, vector<8x512xf32>
    %108 = tpu.concatenate %99, %100, %101, %102, %103, %104, %105, %106, %107 in 0 : vector<8x512xf32>, vector<8x512xf32>, vector<8x512xf32>, vector<8x512xf32>, vector<8x512xf32>, vector<8x512xf32>, vector<8x512xf32>, vector<8x512xf32>, vector<8x512xf32> -> vector<72x512xf32>
    %c0_64 = arith.constant 0 : index
    %c0_65 = arith.constant 0 : index
    %109 = vector.load %arg5[%c0_64, %c0_65] : memref<4x72xf32, #tpu.memory_space<vmem>>, vector<4x72xf32>
    %cst_66 = arith.constant dense<0.000000e+00> : vector<4x512xf32>
    %110 = tpu.matmul %109, %108, %cst_66 {dimension_numbers = #tpu.dot_dimension_numbers<[1], [0], [0], [1], [0, 0, 1, 1], [], []>} : vector<4x72xf32>, vector<72x512xf32>, vector<4x512xf32> -> vector<4x512xf32>
    %c0_67 = arith.constant 0 : index
    %c0_68 = arith.constant 0 : index
    %111 = vector.load %arg10[%c0_67, %c0_68] : memref<4x1xf32, #tpu.memory_space<vmem>>, vector<4x1xf32>
    %112 = vector.broadcast %111 : vector<4x1xf32> to vector<4x512xf32>
    %113 = arith.addf %110, %112 : vector<4x512xf32>
    %114 = vector.broadcast %28 : vector<1x512xf32> to vector<4x512xf32>
    %115 = arith.mulf %113, %114 : vector<4x512xf32>
    %cst_69 = arith.constant dense<0.000000e+00> : vector<4xf32>
    %116 = vector.multi_reduction <add>, %115, %cst_69 [1] : vector<4x512xf32> to vector<4xf32>
    %117 = vector.shape_cast %116 : vector<4xf32> to vector<4x1xf32>
    %cst_70 = arith.constant 0.00347222225 : f32
    %118 = vector.broadcast %cst_70 : f32 to vector<4x1xf32>
    %119 = arith.mulf %117, %118 : vector<4x1xf32>
    %120 = vector.broadcast %119 : vector<4x1xf32> to vector<4x512xf32>
    %121 = arith.subf %113, %120 : vector<4x512xf32>
    %122 = arith.mulf %121, %121 : vector<4x512xf32>
    %123 = vector.broadcast %28 : vector<1x512xf32> to vector<4x512xf32>
    %124 = arith.mulf %122, %123 : vector<4x512xf32>
    %cst_71 = arith.constant dense<0.000000e+00> : vector<4xf32>
    %125 = vector.multi_reduction <add>, %124, %cst_71 [1] : vector<4x512xf32> to vector<4xf32>
    %126 = vector.shape_cast %125 : vector<4xf32> to vector<4x1xf32>
    %cst_72 = arith.constant 0.00347222225 : f32
    %127 = vector.broadcast %cst_72 : f32 to vector<4x1xf32>
    %128 = arith.mulf %126, %127 : vector<4x1xf32>
    %cst_73 = arith.constant 9.99999974E-6 : f32
    %129 = vector.broadcast %cst_73 : f32 to vector<4x1xf32>
    %130 = arith.addf %128, %129 : vector<4x1xf32>
    %131 = math.rsqrt %130 : vector<4x1xf32>
    %132 = vector.broadcast %131 : vector<4x1xf32> to vector<4x512xf32>
    %133 = arith.mulf %121, %132 : vector<4x512xf32>
    %c0_74 = arith.constant 0 : index
    %c0_75 = arith.constant 0 : index
    %134 = vector.load %arg11[%c0_74, %c0_75] : memref<4x1xf32, #tpu.memory_space<vmem>>, vector<4x1xf32>
    %135 = vector.broadcast %134 : vector<4x1xf32> to vector<4x512xf32>
    %136 = arith.mulf %133, %135 : vector<4x512xf32>
    %c0_76 = arith.constant 0 : index
    %c0_77 = arith.constant 0 : index
    %137 = vector.load %arg12[%c0_76, %c0_77] : memref<4x1xf32, #tpu.memory_space<vmem>>, vector<4x1xf32>
    %138 = vector.broadcast %137 : vector<4x1xf32> to vector<4x512xf32>
    %139 = arith.addf %136, %138 : vector<4x512xf32>
    %cst_78 = arith.constant 0.000000e+00 : f32
    %140 = vector.broadcast %cst_78 : f32 to vector<4x512xf32>
    %141 = arith.maximumf %139, %140 : vector<4x512xf32>
    %c0_79 = arith.constant 0 : index
    %c0_80 = arith.constant 0 : index
    %142 = vector.load %arg13[%c0_79, %c0_80] : memref<4x512xf32, #tpu.memory_space<vmem>>, vector<4x512xf32>
    tpu.vector_store %arg13[%c0_79, %c0_80], %141 {strides = array<i32>} : memref<4x512xf32, #tpu.memory_space<vmem>>, vector<4x512xf32>,
    return
  }
  func.func @transform_0(%arg0: i32) -> (i32, i32) {
    %c0_i32 = arith.constant 0 : i32
    %c0_i32_0 = arith.constant 0 : i32
    %c0_i32_1 = arith.constant 0 : i32
    return %c0_i32, %c0_i32_0 : i32, i32
  }
  func.func @transform_1(%arg0: i32) -> (i32, i32) {
    %c0_i32 = arith.constant 0 : i32
    %c0_i32_0 = arith.constant 0 : i32
    %c0_i32_1 = arith.constant 0 : i32
    return %c0_i32, %c0_i32_0 : i32, i32
  }
  func.func @transform_2(%arg0: i32) -> (i32, i32) {
    %c0_i32 = arith.constant 0 : i32
    %c0_i32_0 = arith.constant 0 : i32
    %c0_i32_1 = arith.constant 0 : i32
    return %c0_i32, %c0_i32_0 : i32, i32
  }
  func.func @transform_3(%arg0: i32) -> (i32, i32) {
    %c0_i32 = arith.constant 0 : i32
    %c0_i32_0 = arith.constant 0 : i32
    %c0_i32_1 = arith.constant 0 : i32
    return %c0_i32, %c0_i32_0 : i32, i32
  }
  func.func @transform_4(%arg0: i32) -> (i32, i32) {
    %c0_i32 = arith.constant 0 : i32
    %c0_i32_0 = arith.constant 0 : i32
    %c0_i32_1 = arith.constant 0 : i32
    return %c0_i32, %c0_i32_0 : i32, i32
  }
  func.func @transform_5(%arg0: i32) -> (i32, i32) {
    %c0_i32 = arith.constant 0 : i32
    %c0_i32_0 = arith.constant 0 : i32
    %c0_i32_1 = arith.constant 0 : i32
    return %c0_i32, %c0_i32_0 : i32, i32
  }
  func.func @transform_6(%arg0: i32) -> (i32, i32) {
    %c0_i32 = arith.constant 0 : i32
    %c0_i32_0 = arith.constant 0 : i32
    %c0_i32_1 = arith.constant 0 : i32
    return %c0_i32, %c0_i32_0 : i32, i32
  }
  func.func @transform_7(%arg0: i32) -> (i32, i32) {
    %c0_i32 = arith.constant 0 : i32
    %c0_i32_0 = arith.constant 0 : i32
    %c0_i32_1 = arith.constant 0 : i32
    return %c0_i32, %c0_i32_0 : i32, i32
  }
  func.func @transform_8(%arg0: i32) -> (i32, i32) {
    %c0_i32 = arith.constant 0 : i32
    %c0_i32_0 = arith.constant 0 : i32
    %c0_i32_1 = arith.constant 0 : i32
    return %c0_i32, %c0_i32_0 : i32, i32
  }
  func.func @transform_9(%arg0: i32) -> (i32, i32) {
    %c0_i32 = arith.constant 0 : i32
    %c0_i32_0 = arith.constant 0 : i32
    %c0_i32_1 = arith.constant 0 : i32
    return %c0_i32, %c0_i32_0 : i32, i32
  }
  func.func @transform_10(%arg0: i32) -> (i32, i32) {
    %c0_i32 = arith.constant 0 : i32
    %c0_i32_0 = arith.constant 0 : i32
    %c0_i32_1 = arith.constant 0 : i32
    return %c0_i32, %c0_i32_0 : i32, i32
  }
  func.func @transform_11(%arg0: i32) -> (i32, i32) {
    %c0_i32 = arith.constant 0 : i32
    %c0_i32_0 = arith.constant 0 : i32
    %c0_i32_1 = arith.constant 0 : i32
    return %c0_i32, %c0_i32_0 : i32, i32
  }
  func.func @transform_12(%arg0: i32) -> (i32, i32) {
    %c0_i32 = arith.constant 0 : i32
    %c0_i32_0 = arith.constant 0 : i32
    %c0_i32_1 = arith.constant 0 : i32
    return %c0_i32, %c0_i32_0 : i32, i32
  }
}

</mosaic_0001>

<llo_original>
// kernel: decoder_component_forward.1
$region0: #{decoder_component_forward.1}
  #allocation0 [shape = 'u32[]', space=smem, size = 0x4, offset = 0x4, fixed_abs, tag = 'smem constant byte address 0x4 - core index']
  #allocation1 [shape = 'u32[72,128]{1,0:T(1,128)}', space=vmem, size = 0x9000, scoped, tag = 'internal scratch']
  #allocation2 [shape = 'f32[8,640]{1,0:T(8,128)}', space=vmem, size = 0x5000, scoped, tag = 'scratch operand']
  #allocation3 [shape = 'f32[8,640]{1,0:T(8,128)}', space=vmem, size = 0x5000, scoped, tag = 'scratch operand']
  %s0 = inlined_call_operand.vmem [shape: f32[8,512], index: 0, kind: input, shape index: {}]
  %s1 = inlined_call_operand.vmem [shape: f32[4,512], index: 1, kind: input, shape index: {}]
  %s2 = inlined_call_operand.vmem [shape: f32[16,8], index: 2, kind: input, shape index: {}]
  %s3 = inlined_call_operand.vmem [shape: f32[4,72], index: 3, kind: input, shape index: {}]
  %s4 = inlined_call_operand.vmem [shape: f32[4,72], index: 4, kind: input, shape index: {}]
  %s5 = inlined_call_operand.vmem [shape: f32[4,1], index: 5, kind: input, shape index: {}]
  %s6 = inlined_call_operand.vmem [shape: f32[4,1], index: 6, kind: input, shape index: {}]
  %s7 = inlined_call_operand.vmem [shape: f32[4,1], index: 7, kind: input, shape index: {}]
  %s8 = inlined_call_operand.vmem [shape: f32[4,1], index: 8, kind: input, shape index: {}]
  %s9 = inlined_call_operand.vmem [shape: f32[4,1], index: 9, kind: input, shape index: {}]
  %s10 = inlined_call_operand.vmem [shape: f32[4,1], index: 10, kind: input, shape index: {}]
  %s11 = inlined_call_operand.vmem [shape: f32[4,1], index: 11, kind: input, shape index: {}]
  %s12 = inlined_call_operand.vmem [shape: f32[4,512], index: 12, kind: output, shape index: {}]
  %s13 = sld [smem:[#allocation0]]
  $region58: #{decoder_component_forward.1} parent=0
    _
  %s15 = ssub.s32 1, %s13
  %s16 = scalar_select 0, %s15, %s13
  // Predicated region
  $region2: #{decoder_component_forward.1} parent=0 // pred_check
    _
  $region3: #{decoder_component_forward.1} parent=0 // pred_check_branch
    %18 = sbr.rel (0) target = $region5
  $region4: #{decoder_component_forward.1} parent=0 // pred_region
    _
  $region5: #{decoder_component_forward.1} parent=0 // pred_fallthru
    _
  // Predicated region
  $region6: #{decoder_component_forward.1} parent=0 // pred_check
    _
  $region7: #{decoder_component_forward.1} parent=0 // pred_check_branch
    %20 = sbr.rel (0) target = $region9
  $region8: #{decoder_component_forward.1} parent=0 // pred_region
    _
  $region9: #{decoder_component_forward.1} parent=0 // pred_fallthru
    _
  // Predicated region
  $region10: #{decoder_component_forward.1} parent=0 // pred_check
    _
  $region11: #{decoder_component_forward.1} parent=0 // pred_check_branch
    %22 = sbr.rel (0) target = $region13
  $region12: #{decoder_component_forward.1} parent=0 // pred_region
    _
  $region13: #{decoder_component_forward.1} parent=0 // pred_fallthru
    _
  // Predicated region
  $region14: #{decoder_component_forward.1} parent=0 // pred_check
    _
  $region15: #{decoder_component_forward.1} parent=0 // pred_check_branch
    %24 = sbr.rel (0) target = $region17
  $region16: #{decoder_component_forward.1} parent=0 // pred_region
    _
  $region17: #{decoder_component_forward.1} parent=0 // pred_fallthru
    _
  // Predicated region
  $region18: #{decoder_component_forward.1} parent=0 // pred_check
    _
  $region19: #{decoder_component_forward.1} parent=0 // pred_check_branch
    %26 = sbr.rel (0) target = $region21
  $region20: #{decoder_component_forward.1} parent=0 // pred_region
    _
  $region21: #{decoder_component_forward.1} parent=0 // pred_fallthru
    _
  // Predicated region
  $region22: #{decoder_component_forward.1} parent=0 // pred_check
    _
  $region23: #{decoder_component_forward.1} parent=0 // pred_check_branch
    %28 = sbr.rel (0) target = $region25
  $region24: #{decoder_component_forward.1} parent=0 // pred_region
    _
  $region25: #{decoder_component_forward.1} parent=0 // pred_fallthru
    _
  // Predicated region
  $region26: #{decoder_component_forward.1} parent=0 // pred_check
    _
  $region27: #{decoder_component_forward.1} parent=0 // pred_check_branch
    %30 = sbr.rel (0) target = $region29
  $region28: #{decoder_component_forward.1} parent=0 // pred_region
    _
  $region29: #{decoder_component_forward.1} parent=0 // pred_fallthru
    _
  // Predicated region
  $region30: #{decoder_component_forward.1} parent=0 // pred_check
    _
  $region31: #{decoder_component_forward.1} parent=0 // pred_check_branch
    %32 = sbr.rel (0) target = $region33
  $region32: #{decoder_component_forward.1} parent=0 // pred_region
    _
  $region33: #{decoder_component_forward.1} parent=0 // pred_fallthru
    _
  // Predicated region
  $region34: #{decoder_component_forward.1} parent=0 // pred_check
    _
  $region35: #{decoder_component_forward.1} parent=0 // pred_check_branch
    %34 = sbr.rel (0) target = $region37
  $region36: #{decoder_component_forward.1} parent=0 // pred_region
    _
  $region37: #{decoder_component_forward.1} parent=0 // pred_fallthru
    _
  // Predicated region
  $region38: #{decoder_component_forward.1} parent=0 // pred_check
    _
  $region39: #{decoder_component_forward.1} parent=0 // pred_check_branch
    %36 = sbr.rel (0) target = $region41
  $region40: #{decoder_component_forward.1} parent=0 // pred_region
    _
  $region41: #{decoder_component_forward.1} parent=0 // pred_fallthru
    _
  // Predicated region
  $region42: #{decoder_component_forward.1} parent=0 // pred_check
    _
  $region43: #{decoder_component_forward.1} parent=0 // pred_check_branch
    %38 = sbr.rel (0) target = $region45
  $region44: #{decoder_component_forward.1} parent=0 // pred_region
    _
  $region45: #{decoder_component_forward.1} parent=0 // pred_fallthru
    _
  // Predicated region
  $region46: #{decoder_component_forward.1} parent=0 // pred_check
    _
  $region47: #{decoder_component_forward.1} parent=0 // pred_check_branch
    %40 = sbr.rel (0) target = $region49
  $region48: #{decoder_component_forward.1} parent=0 // pred_region
    _
  $region49: #{decoder_component_forward.1} parent=0 // pred_fallthru
    _
  %v41 = vlaneseq
  %v42 = vand.u32 %v41, 127
  %v43 = vadd.s32 %v42, 128
  %v44 = vadd.s32 %v42, 256
  %v45 = vadd.s32 %v42, 384
  %v46 = vand.u32 %v42, 15
  %v47 = vand.u32 %v43, 15
  %v48 = vand.u32 %v44, 15
  %v49 = vand.u32 %v45, 15
  %v50 = vshra.s32 %v42, 4
  %v51 = vshra.s32 %v43, 4
  %v52 = vshra.s32 %v44, 4
  %v53 = vshra.s32 %v45, 4
  %v54 = vand.u32 %v50, 15
  %v55 = vand.u32 %v51, 15
  %v56 = vand.u32 %v52, 15
  %v57 = vand.u32 %v53, 15
  %v58 = vand.u32 %v54, 1
  %v59 = vand.u32 %v55, 1
  %v60 = vand.u32 %v56, 1
  %v61 = vand.u32 %v57, 1
  %vm62 = vcmp.eq.s32.totalorder %v58, 0
  %vm63 = vcmp.eq.s32.totalorder %v59, 0
  %vm64 = vcmp.eq.s32.totalorder %v60, 0
  %vm65 = vcmp.eq.s32.totalorder %v61, 0
  %v66 = vand.u32 %v46, 1
  %v67 = vand.u32 %v47, 1
  %v68 = vand.u32 %v48, 1
  %v69 = vand.u32 %v49, 1
  %vm70 = vcmp.eq.s32.totalorder %v66, 0
  %vm71 = vcmp.eq.s32.totalorder %v67, 0
  %vm72 = vcmp.eq.s32.totalorder %v68, 0
  %vm73 = vcmp.eq.s32.totalorder %v69, 0
  %vm74 = vcmp.lt.s32.totalorder %v54, 14
  %vm75 = vcmp.lt.s32.totalorder %v55, 14
  %vm76 = vcmp.lt.s32.totalorder %v56, 14
  %vm77 = vcmp.lt.s32.totalorder %v57, 14
  %vm78 = vcmp.lt.s32.totalorder %v46, 14
  %vm79 = vcmp.lt.s32.totalorder %v47, 14
  %vm80 = vcmp.lt.s32.totalorder %v48, 14
  %vm81 = vcmp.lt.s32.totalorder %v49, 14
  %vm82 = vmand %vm74, %vm78
  %vm83 = vmand %vm75, %vm79
  %vm84 = vmand %vm76, %vm80
  %vm85 = vmand %vm77, %vm81
  %v86 = vsel %vm82, 1, 0
  %v87 = vsel %vm83, 1, 0
  %v88 = vsel %vm84, 1, 0
  %v89 = vsel %vm85, 1, 0
  %v90 = vcvt.s32.f32 %v86
  %v91 = vcvt.s32.f32 %v87
  %v92 = vcvt.s32.f32 %v88
  %v93 = vcvt.s32.f32 %v89
  %vm94 = vcmp.lt.s32.totalorder %v54, 12
  %vm95 = vcmp.lt.s32.totalorder %v55, 12
  %vm96 = vcmp.lt.s32.totalorder %v56, 12
  %vm97 = vcmp.lt.s32.totalorder %v57, 12
  %vm98 = vcmp.lt.s32.totalorder %v46, 12
  %vm99 = vcmp.lt.s32.totalorder %v47, 12
  %vm100 = vcmp.lt.s32.totalorder %v48, 12
  %vm101 = vcmp.lt.s32.totalorder %v49, 12
  %vm102 = vmand %vm94, %vm98
  %vm103 = vmand %vm95, %vm99
  %vm104 = vmand %vm96, %vm100
  %vm105 = vmand %vm97, %vm101
  %v106 = vsel %vm102, 1, 0
  %v107 = vsel %vm103, 1, 0
  %v108 = vsel %vm104, 1, 0
  %v109 = vsel %vm105, 1, 0
  %v110 = vcvt.s32.f32 %v106
  %v111 = vcvt.s32.f32 %v107
  %v112 = vcvt.s32.f32 %v108
  %v113 = vcvt.s32.f32 %v109
  %v114 = vld [vmem:[%s2] sm:$0xff]
  %v115 = vld [vmem:[%s2 + $0x8] sm:$0xff]
  %v116 = vld [vmem:[%s0] sm:$0xff]
  %v117 = vld [vmem:[%s0 + $0x8] sm:$0xff]
  %v118 = vld [vmem:[%s0 + $0x10] sm:$0xff]
  %v119 = vld [vmem:[%s0 + $0x18] sm:$0xff]
  %vm120 = vcmask 64512
  %v122 = vsel %vm120, %v114, 0
  %v125 = vsel %vm120, %v115, 0
  %127 = vmatpush.msra.mxu0 0.0
  %128 = vmatpush.msra.mxu0 0.0
  %129 = vmatpush.msra.mxu0 0.0
  %130 = vmatpush.msra.mxu0 0.0
  %131 = vmatpush.msra.mxu0 0.0
  %132 = vmatpush.msra.mxu0 0.0
  %133 = vmatpush.msra.mxu0 0.0
  %134 = vmatpush.msra.mxu0 0.0
  %135 = vmatpush.msra.mxu0 0.0
  %136 = vmatpush.msra.mxu0 0.0
  %137 = vmatpush.msra.mxu0 0.0
  %138 = vmatpush.msra.mxu0 0.0
  %139 = vmatpush.msra.mxu0 0.0
  %140 = vmatpush.msra.mxu0 0.0
  %141 = vmatpush.msra.mxu0 0.0
  %142 = vmatpush.msra.mxu0 %v116
  %143 = vmatmul.f32.gmra.mxu0 %v122
  %v144 = vpop.f32.mrf.mxu0
  %v145 = vadd.f32 0.0, %v144
  %146 = vmatmul.f32.gmra.mxu0 %v125
  %v147 = vpop.f32.mrf.mxu0
  %v148 = vadd.f32 0.0, %v147
  %149 = vdwg.mxu0
  %150 = vmatpush.msra.mxu0 0.0
  %151 = vmatpush.msra.mxu0 0.0
  %152 = vmatpush.msra.mxu0 0.0
  %153 = vmatpush.msra.mxu0 0.0
  %154 = vmatpush.msra.mxu0 0.0
  %155 = vmatpush.msra.mxu0 0.0
  %156 = vmatpush.msra.mxu0 0.0
  %157 = vmatpush.msra.mxu0 0.0
  %158 = vmatpush.msra.mxu0 0.0
  %159 = vmatpush.msra.mxu0 0.0
  %160 = vmatpush.msra.mxu0 0.0
  %161 = vmatpush.msra.mxu0 0.0
  %162 = vmatpush.msra.mxu0 0.0
  %163 = vmatpush.msra.mxu0 0.0
  %164 = vmatpush.msra.mxu0 0.0
  %165 = vmatpush.msra.mxu0 %v117
  %166 = vmatmul.f32.gmra.mxu0 %v122
  %v167 = vpop.f32.mrf.mxu0
  %v168 = vadd.f32 0.0, %v167
  %169 = vmatmul.f32.gmra.mxu0 %v125
  %v170 = vpop.f32.mrf.mxu0
  %v171 = vadd.f32 0.0, %v170
  %172 = vdwg.mxu0
  %173 = vmatpush.msra.mxu0 0.0
  %174 = vmatpush.msra.mxu0 0.0
  %175 = vmatpush.msra.mxu0 0.0
  %176 = vmatpush.msra.mxu0 0.0
  %177 = vmatpush.msra.mxu0 0.0
  %178 = vmatpush.msra.mxu0 0.0
  %179 = vmatpush.msra.mxu0 0.0
  %180 = vmatpush.msra.mxu0 0.0
  %181 = vmatpush.msra.mxu0 0.0
  %182 = vmatpush.msra.mxu0 0.0
  %183 = vmatpush.msra.mxu0 0.0
  %184 = vmatpush.msra.mxu0 0.0
  %185 = vmatpush.msra.mxu0 0.0
  %186 = vmatpush.msra.mxu0 0.0
  %187 = vmatpush.msra.mxu0 0.0
  %188 = vmatpush.msra.mxu0 %v118
  %189 = vmatmul.f32.gmra.mxu0 %v122
  %v190 = vpop.f32.mrf.mxu0
  %v191 = vadd.f32 0.0, %v190
  %192 = vmatmul.f32.gmra.mxu0 %v125
  %v193 = vpop.f32.mrf.mxu0
  %v194 = vadd.f32 0.0, %v193
  %195 = vdwg.mxu0
  %196 = vmatpush.msra.mxu0 0.0
  %197 = vmatpush.msra.mxu0 0.0
  %198 = vmatpush.msra.mxu0 0.0
  %199 = vmatpush.msra.mxu0 0.0
  %200 = vmatpush.msra.mxu0 0.0
  %201 = vmatpush.msra.mxu0 0.0
  %202 = vmatpush.msra.mxu0 0.0
  %203 = vmatpush.msra.mxu0 0.0
  %204 = vmatpush.msra.mxu0 0.0
  %205 = vmatpush.msra.mxu0 0.0
  %206 = vmatpush.msra.mxu0 0.0
  %207 = vmatpush.msra.mxu0 0.0
  %208 = vmatpush.msra.mxu0 0.0
  %209 = vmatpush.msra.mxu0 0.0
  %210 = vmatpush.msra.mxu0 0.0
  %211 = vmatpush.msra.mxu0 %v119
  %212 = vmatmul.f32.gmra.mxu0 %v122
  %v213 = vpop.f32.mrf.mxu0
  %v214 = vadd.f32 0.0, %v213
  %215 = vmatmul.f32.gmra.mxu0 %v125
  %v216 = vpop.f32.mrf.mxu0
  %v217 = vadd.f32 0.0, %v216
  %218 = vdwg.mxu0
  %v219 = vsel %vm70, 1, 0
  %v220 = vsel %vm71, 1, 0
  %v221 = vsel %vm72, 1, 0
  %v222 = vsel %vm73, 1, 0
  %vm223 = vcmp.eq.s32.totalorder %v219, 1
  %vm224 = vcmp.eq.s32.totalorder %v220, 1
  %vm225 = vcmp.eq.s32.totalorder %v221, 1
  %vm226 = vcmp.eq.s32.totalorder %v222, 1
  %v231 = vrot.slane %v145, 4
  %v232 = vrot.slane %v168, 4
  %v233 = vrot.slane %v191, 4
  %v234 = vrot.slane %v214, 4
  %v239 = vsel %vm223, %v145, %v231
  %v240 = vsel %vm224, %v168, %v232
  %v241 = vsel %vm225, %v191, %v233
  %v242 = vsel %vm226, %v214, %v234
  %v247 = vrot.slane %v148, 4
  %v248 = vrot.slane %v171, 4
  %v249 = vrot.slane %v194, 4
  %v250 = vrot.slane %v217, 4
  %v255 = vsel %vm223, %v148, %v247
  %v256 = vsel %vm224, %v171, %v248
  %v257 = vsel %vm225, %v194, %v249
  %v258 = vsel %vm226, %v217, %v250
  %v259 = vsel %vm62, 1, 0
  %v260 = vsel %vm63, 1, 0
  %v261 = vsel %vm64, 1, 0
  %v262 = vsel %vm65, 1, 0
  %vm263 = vcmp.eq.s32.totalorder %v259, 1
  %vm264 = vcmp.eq.s32.totalorder %v260, 1
  %vm265 = vcmp.eq.s32.totalorder %v261, 1
  %vm266 = vcmp.eq.s32.totalorder %v262, 1
  %v267 = vsel %vm263, %v239, %v255
  %v268 = vsel %vm264, %v240, %v256
  %v269 = vsel %vm265, %v241, %v257
  %v270 = vsel %vm266, %v242, %v258
  %v271 = vld [vmem:[%s5] sm:$0xf]
  %273 = vset.pattern.permute.xlu0 0
  %274 = vperm.xlu0 %273, %v271
  %v275 = vpop.permute.xlu0 %274
  %v277 = vadd.f32 %v267, %v275
  %v278 = vadd.f32 %v268, %v275
  %v279 = vadd.f32 %v269, %v275
  %v280 = vadd.f32 %v270, %v275
  %v281 = vld [vmem:[%s1] sm:$0xff]
  %v282 = vld [vmem:[%s1 + $0x8] sm:$0xff]
  %s285 = scalar_lea.vmem [#allocation1], 1
  %286 = vst [vmem:[%s285] ss:$2 sm:$0xff] %v281
  %s287 = scalar_lea.vmem [#allocation1], 17
  %288 = vst [vmem:[%s287] ss:$2 sm:$0xff] %v282
  %v289 = vld.sshfl [vmem:[#allocation1] sm:$0xff pattern:$0x75316420]
  %v290 = vld.sshfl [vmem:[#allocation1 + $0x8] sm:$0xff pattern:$0x75316420]
  %v291 = vld.sshfl [vmem:[#allocation1 + $0x10] sm:$0xff pattern:$0x75316420]
  %v292 = vld.sshfl [vmem:[#allocation1 + $0x18] sm:$0xff pattern:$0x75316420]
  %vm297 = vcmask 1043456
  %v298 = vsel %vm297, %v277, %v289
  %v299 = vsel %vm297, %v278, %v290
  %v300 = vsel %vm297, %v279, %v291
  %v301 = vsel %vm297, %v280, %v292
  %302 = vst [vmem:[#allocation2] sm:$0xff] %v298
  %303 = vst [vmem:[#allocation2 + $0x8] sm:$0xff] %v299
  %304 = vst [vmem:[#allocation2 + $0x10] sm:$0xff] %v300
  %305 = vst [vmem:[#allocation2 + $0x18] sm:$0xff] %v301
  %306 = vst [vmem:[#allocation2 + $0x20] sm:$0xff] 0.0
  %v307 = vld [vmem:[#allocation2] sm:$0xff]
  %v308 = vld [vmem:[#allocation2 + $0x8] sm:$0xff]
  %v309 = vld [vmem:[#allocation2 + $0x10] sm:$0xff]
  %v310 = vld [vmem:[#allocation2 + $0x18] sm:$0xff]
  %v311 = vld [vmem:[#allocation2] sm:$0xff]
  %v312 = vld [vmem:[#allocation2 + $0x8] sm:$0xff]
  %v313 = vld [vmem:[#allocation2 + $0x10] sm:$0xff]
  %v314 = vld [vmem:[#allocation2 + $0x18] sm:$0xff]
  %v315 = vld [vmem:[#allocation2 + $0x20] sm:$0xff]
  %321 = vrot.lane.b32.xlu0 %v311, 127
  %v322 = vpop.permute.xlu0 %321
  %323 = vrot.lane.b32.xlu0 %v312, 127
  %v324 = vpop.permute.xlu0 %323
  %325 = vrot.lane.b32.xlu0 %v313, 127
  %v326 = vpop.permute.xlu0 %325
  %327 = vrot.lane.b32.xlu0 %v314, 127
  %v328 = vpop.permute.xlu0 %327
  %329 = vrot.lane.b32.xlu0 %v315, 127
  %v330 = vpop.permute.xlu0 %329
  %vm331 = vcmask 1039360
  %v332 = vsel %vm331, %v322, %v324
  %v333 = vsel %vm331, %v324, %v326
  %v334 = vsel %vm331, %v326, %v328
  %v335 = vsel %vm331, %v328, %v330
  %340 = vrot.lane.b32.xlu0 %v311, 126
  %v341 = vpop.permute.xlu0 %340
  %342 = vrot.lane.b32.xlu0 %v312, 126
  %v343 = vpop.permute.xlu0 %342
  %344 = vrot.lane.b32.xlu0 %v313, 126
  %v345 = vpop.permute.xlu0 %344
  %346 = vrot.lane.b32.xlu0 %v314, 126
  %v347 = vpop.permute.xlu0 %346
  %348 = vrot.lane.b32.xlu0 %v315, 126
  %v349 = vpop.permute.xlu0 %348
  %vm350 = vcmask 1031168
  %v351 = vsel %vm350, %v341, %v343
  %v352 = vsel %vm350, %v343, %v345
  %v353 = vsel %vm350, %v345, %v347
  %v354 = vsel %vm350, %v347, %v349
  %359 = vrot.lane.b32.xlu0 %v311, 112
  %v360 = vpop.permute.xlu0 %359
  %361 = vrot.lane.b32.xlu0 %v312, 112
  %v362 = vpop.permute.xlu0 %361
  %363 = vrot.lane.b32.xlu0 %v313, 112
  %v364 = vpop.permute.xlu0 %363
  %365 = vrot.lane.b32.xlu0 %v314, 112
  %v366 = vpop.permute.xlu0 %365
  %367 = vrot.lane.b32.xlu0 %v315, 112
  %v368 = vpop.permute.xlu0 %367
  %vm369 = vcmask 916480
  %v370 = vsel %vm369, %v360, %v362
  %v371 = vsel %vm369, %v362, %v364
  %v372 = vsel %vm369, %v364, %v366
  %v373 = vsel %vm369, %v366, %v368
  %378 = vrot.lane.b32.xlu0 %v311, 111
  %v379 = vpop.permute.xlu0 %378
  %380 = vrot.lane.b32.xlu0 %v312, 111
  %v381 = vpop.permute.xlu0 %380
  %382 = vrot.lane.b32.xlu0 %v313, 111
  %v383 = vpop.permute.xlu0 %382
  %384 = vrot.lane.b32.xlu0 %v314, 111
  %v385 = vpop.permute.xlu0 %384
  %386 = vrot.lane.b32.xlu0 %v315, 111
  %v387 = vpop.permute.xlu0 %386
  %vm388 = vcmask 908288
  %v389 = vsel %vm388, %v379, %v381
  %v390 = vsel %vm388, %v381, %v383
  %v391 = vsel %vm388, %v383, %v385
  %v392 = vsel %vm388, %v385, %v387
  %397 = vrot.lane.b32.xlu0 %v311, 110
  %v398 = vpop.permute.xlu0 %397
  %399 = vrot.lane.b32.xlu0 %v312, 110
  %v400 = vpop.permute.xlu0 %399
  %401 = vrot.lane.b32.xlu0 %v313, 110
  %v402 = vpop.permute.xlu0 %401
  %403 = vrot.lane.b32.xlu0 %v314, 110
  %v404 = vpop.permute.xlu0 %403
  %405 = vrot.lane.b32.xlu0 %v315, 110
  %v406 = vpop.permute.xlu0 %405
  %vm407 = vcmask 900096
  %v408 = vsel %vm407, %v398, %v400
  %v409 = vsel %vm407, %v400, %v402
  %v410 = vsel %vm407, %v402, %v404
  %v411 = vsel %vm407, %v404, %v406
  %416 = vrot.lane.b32.xlu0 %v311, 96
  %v417 = vpop.permute.xlu0 %416
  %418 = vrot.lane.b32.xlu0 %v312, 96
  %v419 = vpop.permute.xlu0 %418
  %420 = vrot.lane.b32.xlu0 %v313, 96
  %v421 = vpop.permute.xlu0 %420
  %422 = vrot.lane.b32.xlu0 %v314, 96
  %v423 = vpop.permute.xlu0 %422
  %424 = vrot.lane.b32.xlu0 %v315, 96
  %v425 = vpop.permute.xlu0 %424
  %vm426 = vcmask 785408
  %v427 = vsel %vm426, %v417, %v419
  %v428 = vsel %vm426, %v419, %v421
  %v429 = vsel %vm426, %v421, %v423
  %v430 = vsel %vm426, %v423, %v425
  %435 = vrot.lane.b32.xlu0 %v311, 95
  %v436 = vpop.permute.xlu0 %435
  %437 = vrot.lane.b32.xlu0 %v312, 95
  %v438 = vpop.permute.xlu0 %437
  %439 = vrot.lane.b32.xlu0 %v313, 95
  %v440 = vpop.permute.xlu0 %439
  %441 = vrot.lane.b32.xlu0 %v314, 95
  %v442 = vpop.permute.xlu0 %441
  %443 = vrot.lane.b32.xlu0 %v315, 95
  %v444 = vpop.permute.xlu0 %443
  %vm445 = vcmask 777216
  %v446 = vsel %vm445, %v436, %v438
  %v447 = vsel %vm445, %v438, %v440
  %v448 = vsel %vm445, %v440, %v442
  %v449 = vsel %vm445, %v442, %v444
  %454 = vrot.lane.b32.xlu0 %v311, 94
  %v455 = vpop.permute.xlu0 %454
  %456 = vrot.lane.b32.xlu0 %v312, 94
  %v457 = vpop.permute.xlu0 %456
  %458 = vrot.lane.b32.xlu0 %v313, 94
  %v459 = vpop.permute.xlu0 %458
  %460 = vrot.lane.b32.xlu0 %v314, 94
  %v461 = vpop.permute.xlu0 %460
  %462 = vrot.lane.b32.xlu0 %v315, 94
  %v463 = vpop.permute.xlu0 %462
  %vm464 = vcmask 769024
  %v465 = vsel %vm464, %v455, %v457
  %v466 = vsel %vm464, %v457, %v459
  %v467 = vsel %vm464, %v459, %v461
  %v468 = vsel %vm464, %v461, %v463
  %v473 = vld [vmem:[%s3] sm:$0xf]
  %v474 = vld [vmem:[%s6] sm:$0xf]
  %476 = vset.pattern.permute.xlu0 0
  %477 = vperm.xlu0 %476, %v474
  %v478 = vpop.permute.xlu0 %477
  %vm480 = vcmask 588800
  %v482 = vsel %vm480, %v473, 0
  %484 = vmatpush.msra.mxu0 0.0
  %485 = vmatpush.msra.mxu0 0.0
  %486 = vmatpush.msra.mxu0 0.0
  %487 = vmatpush.msra.mxu0 0.0
  %488 = vmatpush.msra.mxu0 0.0
  %489 = vmatpush.msra.mxu0 0.0
  %490 = vmatpush.msra.mxu0 0.0
  %491 = vmatpush.msra.mxu0 %v465
  %492 = vmatpush.msra.mxu0 %v446
  %493 = vmatpush.msra.mxu0 %v427
  %494 = vmatpush.msra.mxu0 %v408
  %495 = vmatpush.msra.mxu0 %v389
  %496 = vmatpush.msra.mxu0 %v370
  %497 = vmatpush.msra.mxu0 %v351
  %498 = vmatpush.msra.mxu0 %v332
  %499 = vmatpush.msra.mxu0 %v307
  %500 = vmatmul.f32.gmra.mxu0 %v482
  %v501 = vpop.f32.mrf.mxu0
  %v502 = vadd.f32 %v478, %v501
  %503 = vdwg.mxu0
  %504 = vmatpush.msra.mxu0 0.0
  %505 = vmatpush.msra.mxu0 0.0
  %506 = vmatpush.msra.mxu0 0.0
  %507 = vmatpush.msra.mxu0 0.0
  %508 = vmatpush.msra.mxu0 0.0
  %509 = vmatpush.msra.mxu0 0.0
  %510 = vmatpush.msra.mxu0 0.0
  %511 = vmatpush.msra.mxu0 %v466
  %512 = vmatpush.msra.mxu0 %v447
  %513 = vmatpush.msra.mxu0 %v428
  %514 = vmatpush.msra.mxu0 %v409
  %515 = vmatpush.msra.mxu0 %v390
  %516 = vmatpush.msra.mxu0 %v371
  %517 = vmatpush.msra.mxu0 %v352
  %518 = vmatpush.msra.mxu0 %v333
  %519 = vmatpush.msra.mxu0 %v308
  %520 = vmatmul.f32.gmra.mxu0 %v482
  %v521 = vpop.f32.mrf.mxu0
  %v522 = vadd.f32 %v478, %v521
  %523 = vdwg.mxu0
  %524 = vmatpush.msra.mxu0 0.0
  %525 = vmatpush.msra.mxu0 0.0
  %526 = vmatpush.msra.mxu0 0.0
  %527 = vmatpush.msra.mxu0 0.0
  %528 = vmatpush.msra.mxu0 0.0
  %529 = vmatpush.msra.mxu0 0.0
  %530 = vmatpush.msra.mxu0 0.0
  %531 = vmatpush.msra.mxu0 %v467
  %532 = vmatpush.msra.mxu0 %v448
  %533 = vmatpush.msra.mxu0 %v429
  %534 = vmatpush.msra.mxu0 %v410
  %535 = vmatpush.msra.mxu0 %v391
  %536 = vmatpush.msra.mxu0 %v372
  %537 = vmatpush.msra.mxu0 %v353
  %538 = vmatpush.msra.mxu0 %v334
  %539 = vmatpush.msra.mxu0 %v309
  %540 = vmatmul.f32.gmra.mxu0 %v482
  %v541 = vpop.f32.mrf.mxu0
  %v542 = vadd.f32 %v478, %v541
  %543 = vdwg.mxu0
  %544 = vmatpush.msra.mxu0 0.0
  %545 = vmatpush.msra.mxu0 0.0
  %546 = vmatpush.msra.mxu0 0.0
  %547 = vmatpush.msra.mxu0 0.0
  %548 = vmatpush.msra.mxu0 0.0
  %549 = vmatpush.msra.mxu0 0.0
  %550 = vmatpush.msra.mxu0 0.0
  %551 = vmatpush.msra.mxu0 %v468
  %552 = vmatpush.msra.mxu0 %v449
  %553 = vmatpush.msra.mxu0 %v430
  %554 = vmatpush.msra.mxu0 %v411
  %555 = vmatpush.msra.mxu0 %v392
  %556 = vmatpush.msra.mxu0 %v373
  %557 = vmatpush.msra.mxu0 %v354
  %558 = vmatpush.msra.mxu0 %v335
  %559 = vmatpush.msra.mxu0 %v310
  %560 = vmatmul.f32.gmra.mxu0 %v482
  %v561 = vpop.f32.mrf.mxu0
  %v562 = vadd.f32 %v478, %v561
  %563 = vdwg.mxu0
  %v564 = vmul.f32 %v502, %v90
  %v565 = vmul.f32 %v522, %v91
  %v566 = vmul.f32 %v542, %v92
  %v567 = vmul.f32 %v562, %v93
  %v568 = vsel %vm297, %v564, 0.0
  %v569 = vsel %vm297, %v565, 0.0
  %v570 = vadd.f32 %v568, %v569
  %v571 = vsel %vm297, %v566, 0.0
  %v572 = vadd.f32 %v570, %v571
  %v573 = vsel %vm297, %v567, 0.0
  %v574 = vadd.f32 %v572, %v573
  %575 = vadd.xlane.f32.xlu0 %v574
  %v576 = vpop.xlane.xlu0 %575
  %v577 = vmul.f32 %v576, 0.0025510204
  %v578 = vsub.f32 %v502, %v577
  %v579 = vsub.f32 %v522, %v577
  %v580 = vsub.f32 %v542, %v577
  %v581 = vsub.f32 %v562, %v577
  %v582 = vmul.f32 %v578, %v578
  %v583 = vmul.f32 %v579, %v579
  %v584 = vmul.f32 %v580, %v580
  %v585 = vmul.f32 %v581, %v581
  %v586 = vmul.f32 %v582, %v90
  %v587 = vmul.f32 %v583, %v91
  %v588 = vmul.f32 %v584, %v92
  %v589 = vmul.f32 %v585, %v93
  %v590 = vsel %vm297, %v586, 0.0
  %v591 = vsel %vm297, %v587, 0.0
  %v592 = vadd.f32 %v590, %v591
  %v593 = vsel %vm297, %v588, 0.0
  %v594 = vadd.f32 %v592, %v593
  %v595 = vsel %vm297, %v589, 0.0
  %v596 = vadd.f32 %v594, %v595
  %597 = vadd.xlane.f32.xlu0 %v596
  %v598 = vpop.xlane.xlu0 %597
  %v599 = vmul.f32 %v598, 0.0025510204
  %v600 = vadd.f32 %v599, 1e-05
  %v601 = vrsqrt.pop %v600
  %v602 = vmul.f32 %v601, %v600
  %v603 = vmul.f32 %v602, %v601
  %v604 = vmul.f32 0.5, %v603
  %v605 = vsub.f32 1.5, %v604
  %v606 = vmul.f32 %v601, %v605
  %vm607 = vweird.f32 %v600
  %vm608 = vweird.f32 %v601
  %vm609 = vmor %vm607, %vm608
  %v610 = vsel %vm609, %v601, %v606
  %v611 = vmul.f32 %v578, %v610
  %v612 = vmul.f32 %v579, %v610
  %v613 = vmul.f32 %v580, %v610
  %v614 = vmul.f32 %v581, %v610
  %v615 = vld [vmem:[%s7] sm:$0xf]
  %617 = vset.pattern.permute.xlu0 0
  %618 = vperm.xlu0 %617, %v615
  %v619 = vpop.permute.xlu0 %618
  %v621 = vmul.f32 %v611, %v619
  %v622 = vmul.f32 %v612, %v619
  %v623 = vmul.f32 %v613, %v619
  %v624 = vmul.f32 %v614, %v619
  %v625 = vld [vmem:[%s8] sm:$0xf]
  %627 = vset.pattern.permute.xlu0 0
  %628 = vperm.xlu0 %627, %v625
  %v629 = vpop.permute.xlu0 %628
  %v631 = vadd.f32 %v621, %v629
  %v632 = vadd.f32 %v622, %v629
  %v633 = vadd.f32 %v623, %v629
  %v634 = vadd.f32 %v624, %v629
  %v635 = vsel %vm297, %v631, 0.0
  %v636 = vsel %vm297, %v632, 0.0
  %v637 = vsel %vm297, %v633, 0.0
  %v638 = vsel %vm297, %v634, 0.0
  %639 = vst [vmem:[#allocation3] sm:$0xff] %v635
  %640 = vst [vmem:[#allocation3 + $0x8] sm:$0xff] %v636
  %641 = vst [vmem:[#allocation3 + $0x10] sm:$0xff] %v637
  %642 = vst [vmem:[#allocation3 + $0x18] sm:$0xff] %v638
  %643 = vst [vmem:[#allocation3 + $0x20] sm:$0xff] 0.0
  %v644 = vld [vmem:[#allocation3] sm:$0xff]
  %v645 = vld [vmem:[#allocation3 + $0x8] sm:$0xff]
  %v646 = vld [vmem:[#allocation3 + $0x10] sm:$0xff]
  %v647 = vld [vmem:[#allocation3 + $0x18] sm:$0xff]
  %v648 = vld [vmem:[#allocation3] sm:$0xff]
  %v649 = vld [vmem:[#allocation3 + $0x8] sm:$0xff]
  %v650 = vld [vmem:[#allocation3 + $0x10] sm:$0xff]
  %v651 = vld [vmem:[#allocation3 + $0x18] sm:$0xff]
  %v652 = vld [vmem:[#allocation3 + $0x20] sm:$0xff]
  %658 = vrot.lane.b32.xlu0 %v648, 127
  %v659 = vpop.permute.xlu0 %658
  %660 = vrot.lane.b32.xlu0 %v649, 127
  %v661 = vpop.permute.xlu0 %660
  %662 = vrot.lane.b32.xlu0 %v650, 127
  %v663 = vpop.permute.xlu0 %662
  %664 = vrot.lane.b32.xlu0 %v651, 127
  %v665 = vpop.permute.xlu0 %664
  %666 = vrot.lane.b32.xlu0 %v652, 127
  %v667 = vpop.permute.xlu0 %666
  %v668 = vsel %vm331, %v659, %v661
  %v669 = vsel %vm331, %v661, %v663
  %v670 = vsel %vm331, %v663, %v665
  %v671 = vsel %vm331, %v665, %v667
  %676 = vrot.lane.b32.xlu0 %v648, 126
  %v677 = vpop.permute.xlu0 %676
  %678 = vrot.lane.b32.xlu0 %v649, 126
  %v679 = vpop.permute.xlu0 %678
  %680 = vrot.lane.b32.xlu0 %v650, 126
  %v681 = vpop.permute.xlu0 %680
  %682 = vrot.lane.b32.xlu0 %v651, 126
  %v683 = vpop.permute.xlu0 %682
  %684 = vrot.lane.b32.xlu0 %v652, 126
  %v685 = vpop.permute.xlu0 %684
  %v686 = vsel %vm350, %v677, %v679
  %v687 = vsel %vm350, %v679, %v681
  %v688 = vsel %vm350, %v681, %v683
  %v689 = vsel %vm350, %v683, %v685
  %694 = vrot.lane.b32.xlu0 %v648, 112
  %v695 = vpop.permute.xlu0 %694
  %696 = vrot.lane.b32.xlu0 %v649, 112
  %v697 = vpop.permute.xlu0 %696
  %698 = vrot.lane.b32.xlu0 %v650, 112
  %v699 = vpop.permute.xlu0 %698
  %700 = vrot.lane.b32.xlu0 %v651, 112
  %v701 = vpop.permute.xlu0 %700
  %702 = vrot.lane.b32.xlu0 %v652, 112
  %v703 = vpop.permute.xlu0 %702
  %v704 = vsel %vm369, %v695, %v697
  %v705 = vsel %vm369, %v697, %v699
  %v706 = vsel %vm369, %v699, %v701
  %v707 = vsel %vm369, %v701, %v703
  %712 = vrot.lane.b32.xlu0 %v648, 111
  %v713 = vpop.permute.xlu0 %712
  %714 = vrot.lane.b32.xlu0 %v649, 111
  %v715 = vpop.permute.xlu0 %714
  %716 = vrot.lane.b32.xlu0 %v650, 111
  %v717 = vpop.permute.xlu0 %716
  %718 = vrot.lane.b32.xlu0 %v651, 111
  %v719 = vpop.permute.xlu0 %718
  %720 = vrot.lane.b32.xlu0 %v652, 111
  %v721 = vpop.permute.xlu0 %720
  %v722 = vsel %vm388, %v713, %v715
  %v723 = vsel %vm388, %v715, %v717
  %v724 = vsel %vm388, %v717, %v719
  %v725 = vsel %vm388, %v719, %v721
  %730 = vrot.lane.b32.xlu0 %v648, 110
  %v731 = vpop.permute.xlu0 %730
  %732 = vrot.lane.b32.xlu0 %v649, 110
  %v733 = vpop.permute.xlu0 %732
  %734 = vrot.lane.b32.xlu0 %v650, 110
  %v735 = vpop.permute.xlu0 %734
  %736 = vrot.lane.b32.xlu0 %v651, 110
  %v737 = vpop.permute.xlu0 %736
  %738 = vrot.lane.b32.xlu0 %v652, 110
  %v739 = vpop.permute.xlu0 %738
  %v740 = vsel %vm407, %v731, %v733
  %v741 = vsel %vm407, %v733, %v735
  %v742 = vsel %vm407, %v735, %v737
  %v743 = vsel %vm407, %v737, %v739
  %748 = vrot.lane.b32.xlu0 %v648, 96
  %v749 = vpop.permute.xlu0 %748
  %750 = vrot.lane.b32.xlu0 %v649, 96
  %v751 = vpop.permute.xlu0 %750
  %752 = vrot.lane.b32.xlu0 %v650, 96
  %v753 = vpop.permute.xlu0 %752
  %754 = vrot.lane.b32.xlu0 %v651, 96
  %v755 = vpop.permute.xlu0 %754
  %756 = vrot.lane.b32.xlu0 %v652, 96
  %v757 = vpop.permute.xlu0 %756
  %v758 = vsel %vm426, %v749, %v751
  %v759 = vsel %vm426, %v751, %v753
  %v760 = vsel %vm426, %v753, %v755
  %v761 = vsel %vm426, %v755, %v757
  %766 = vrot.lane.b32.xlu0 %v648, 95
  %v767 = vpop.permute.xlu0 %766
  %768 = vrot.lane.b32.xlu0 %v649, 95
  %v769 = vpop.permute.xlu0 %768
  %770 = vrot.lane.b32.xlu0 %v650, 95
  %v771 = vpop.permute.xlu0 %770
  %772 = vrot.lane.b32.xlu0 %v651, 95
  %v773 = vpop.permute.xlu0 %772
  %774 = vrot.lane.b32.xlu0 %v652, 95
  %v775 = vpop.permute.xlu0 %774
  %v776 = vsel %vm445, %v767, %v769
  %v777 = vsel %vm445, %v769, %v771
  %v778 = vsel %vm445, %v771, %v773
  %v779 = vsel %vm445, %v773, %v775
  %784 = vrot.lane.b32.xlu0 %v648, 94
  %v785 = vpop.permute.xlu0 %784
  %786 = vrot.lane.b32.xlu0 %v649, 94
  %v787 = vpop.permute.xlu0 %786
  %788 = vrot.lane.b32.xlu0 %v650, 94
  %v789 = vpop.permute.xlu0 %788
  %790 = vrot.lane.b32.xlu0 %v651, 94
  %v791 = vpop.permute.xlu0 %790
  %792 = vrot.lane.b32.xlu0 %v652, 94
  %v793 = vpop.permute.xlu0 %792
  %v794 = vsel %vm464, %v785, %v787
  %v795 = vsel %vm464, %v787, %v789
  %v796 = vsel %vm464, %v789, %v791
  %v797 = vsel %vm464, %v791, %v793
  %v802 = vld [vmem:[%s4] sm:$0xf]
  %v803 = vld [vmem:[%s9] sm:$0xf]
  %805 = vset.pattern.permute.xlu0 0
  %806 = vperm.xlu0 %805, %v803
  %v807 = vpop.permute.xlu0 %806
  %v810 = vsel %vm480, %v802, 0
  %812 = vmatpush.msra.mxu0 0.0
  %813 = vmatpush.msra.mxu0 0.0
  %814 = vmatpush.msra.mxu0 0.0
  %815 = vmatpush.msra.mxu0 0.0
  %816 = vmatpush.msra.mxu0 0.0
  %817 = vmatpush.msra.mxu0 0.0
  %818 = vmatpush.msra.mxu0 0.0
  %819 = vmatpush.msra.mxu0 %v794
  %820 = vmatpush.msra.mxu0 %v776
  %821 = vmatpush.msra.mxu0 %v758
  %822 = vmatpush.msra.mxu0 %v740
  %823 = vmatpush.msra.mxu0 %v722
  %824 = vmatpush.msra.mxu0 %v704
  %825 = vmatpush.msra.mxu0 %v686
  %826 = vmatpush.msra.mxu0 %v668
  %827 = vmatpush.msra.mxu0 %v644
  %828 = vmatmul.f32.gmra.mxu0 %v810
  %v829 = vpop.f32.mrf.mxu0
  %v830 = vadd.f32 %v807, %v829
  %831 = vdwg.mxu0
  %832 = vmatpush.msra.mxu0 0.0
  %833 = vmatpush.msra.mxu0 0.0
  %834 = vmatpush.msra.mxu0 0.0
  %835 = vmatpush.msra.mxu0 0.0
  %836 = vmatpush.msra.mxu0 0.0
  %837 = vmatpush.msra.mxu0 0.0
  %838 = vmatpush.msra.mxu0 0.0
  %839 = vmatpush.msra.mxu0 %v795
  %840 = vmatpush.msra.mxu0 %v777
  %841 = vmatpush.msra.mxu0 %v759
  %842 = vmatpush.msra.mxu0 %v741
  %843 = vmatpush.msra.mxu0 %v723
  %844 = vmatpush.msra.mxu0 %v705
  %845 = vmatpush.msra.mxu0 %v687
  %846 = vmatpush.msra.mxu0 %v669
  %847 = vmatpush.msra.mxu0 %v645
  %848 = vmatmul.f32.gmra.mxu0 %v810
  %v849 = vpop.f32.mrf.mxu0
  %v850 = vadd.f32 %v807, %v849
  %851 = vdwg.mxu0
  %852 = vmatpush.msra.mxu0 0.0
  %853 = vmatpush.msra.mxu0 0.0
  %854 = vmatpush.msra.mxu0 0.0
  %855 = vmatpush.msra.mxu0 0.0
  %856 = vmatpush.msra.mxu0 0.0
  %857 = vmatpush.msra.mxu0 0.0
  %858 = vmatpush.msra.mxu0 0.0
  %859 = vmatpush.msra.mxu0 %v796
  %860 = vmatpush.msra.mxu0 %v778
  %861 = vmatpush.msra.mxu0 %v760
  %862 = vmatpush.msra.mxu0 %v742
  %863 = vmatpush.msra.mxu0 %v724
  %864 = vmatpush.msra.mxu0 %v706
  %865 = vmatpush.msra.mxu0 %v688
  %866 = vmatpush.msra.mxu0 %v670
  %867 = vmatpush.msra.mxu0 %v646
  %868 = vmatmul.f32.gmra.mxu0 %v810
  %v869 = vpop.f32.mrf.mxu0
  %v870 = vadd.f32 %v807, %v869
  %871 = vdwg.mxu0
  %872 = vmatpush.msra.mxu0 0.0
  %873 = vmatpush.msra.mxu0 0.0
  %874 = vmatpush.msra.mxu0 0.0
  %875 = vmatpush.msra.mxu0 0.0
  %876 = vmatpush.msra.mxu0 0.0
  %877 = vmatpush.msra.mxu0 0.0
  %878 = vmatpush.msra.mxu0 0.0
  %879 = vmatpush.msra.mxu0 %v797
  %880 = vmatpush.msra.mxu0 %v779
  %881 = vmatpush.msra.mxu0 %v761
  %882 = vmatpush.msra.mxu0 %v743
  %883 = vmatpush.msra.mxu0 %v725
  %884 = vmatpush.msra.mxu0 %v707
  %885 = vmatpush.msra.mxu0 %v689
  %886 = vmatpush.msra.mxu0 %v671
  %887 = vmatpush.msra.mxu0 %v647
  %888 = vmatmul.f32.gmra.mxu0 %v810
  %v889 = vpop.f32.mrf.mxu0
  %v890 = vadd.f32 %v807, %v889
  %891 = vdwg.mxu0
  %v892 = vmul.f32 %v830, %v110
  %v893 = vmul.f32 %v850, %v111
  %v894 = vmul.f32 %v870, %v112
  %v895 = vmul.f32 %v890, %v113
  %v896 = vsel %vm297, %v892, 0.0
  %v897 = vsel %vm297, %v893, 0.0
  %v898 = vadd.f32 %v896, %v897
  %v899 = vsel %vm297, %v894, 0.0
  %v900 = vadd.f32 %v898, %v899
  %v901 = vsel %vm297, %v895, 0.0
  %v902 = vadd.f32 %v900, %v901
  %903 = vadd.xlane.f32.xlu0 %v902
  %v904 = vpop.xlane.xlu0 %903
  %v905 = vmul.f32 %v904, 0.0034722222
  %v906 = vsub.f32 %v830, %v905
  %v907 = vsub.f32 %v850, %v905
  %v908 = vsub.f32 %v870, %v905
  %v909 = vsub.f32 %v890, %v905
  %v910 = vmul.f32 %v906, %v906
  %v911 = vmul.f32 %v907, %v907
  %v912 = vmul.f32 %v908, %v908
  %v913 = vmul.f32 %v909, %v909
  %v914 = vmul.f32 %v910, %v110
  %v915 = vmul.f32 %v911, %v111
  %v916 = vmul.f32 %v912, %v112
  %v917 = vmul.f32 %v913, %v113
  %v918 = vsel %vm297, %v914, 0.0
  %v919 = vsel %vm297, %v915, 0.0
  %v920 = vadd.f32 %v918, %v919
  %v921 = vsel %vm297, %v916, 0.0
  %v922 = vadd.f32 %v920, %v921
  %v923 = vsel %vm297, %v917, 0.0
  %v924 = vadd.f32 %v922, %v923
  %925 = vadd.xlane.f32.xlu0 %v924
  %v926 = vpop.xlane.xlu0 %925
  %v927 = vmul.f32 %v926, 0.0034722222
  %v928 = vadd.f32 %v927, 1e-05
  %v929 = vrsqrt.pop %v928
  %v930 = vmul.f32 %v929, %v928
  %v931 = vmul.f32 %v930, %v929
  %v932 = vmul.f32 0.5, %v931
  %v933 = vsub.f32 1.5, %v932
  %v934 = vmul.f32 %v929, %v933
  %vm935 = vweird.f32 %v928
  %vm936 = vweird.f32 %v929
  %vm937 = vmor %vm935, %vm936
  %v938 = vsel %vm937, %v929, %v934
  %v939 = vmul.f32 %v906, %v938
  %v940 = vmul.f32 %v907, %v938
  %v941 = vmul.f32 %v908, %v938
  %v942 = vmul.f32 %v909, %v938
  %v943 = vld [vmem:[%s10] sm:$0xf]
  %945 = vset.pattern.permute.xlu0 0
  %946 = vperm.xlu0 %945, %v943
  %v947 = vpop.permute.xlu0 %946
  %v949 = vmul.f32 %v939, %v947
  %v950 = vmul.f32 %v940, %v947
  %v951 = vmul.f32 %v941, %v947
  %v952 = vmul.f32 %v942, %v947
  %v953 = vld [vmem:[%s11] sm:$0xf]
  %955 = vset.pattern.permute.xlu0 0
  %956 = vperm.xlu0 %955, %v953
  %v957 = vpop.permute.xlu0 %956
  %v959 = vadd.f32 %v949, %v957
  %v960 = vadd.f32 %v950, %v957
  %v961 = vadd.f32 %v951, %v957
  %v962 = vadd.f32 %v952, %v957
  %v963 = vmax.f32 %v959, 0.0
  %v964 = vmax.f32 %v960, 0.0
  %v965 = vmax.f32 %v961, 0.0
  %v966 = vmax.f32 %v962, 0.0
  %v971 = vrot.slane %v964, 4
  %v972 = vrot.slane %v966, 4
  %v973 = vsel %vm297, %v963, %v971
  %v974 = vsel %vm297, %v965, %v972
  %977 = vst [vmem:[%s12] sm:$0xff] %v973
  %978 = vst [vmem:[%s12 + $0x8] sm:$0xff] %v974
  // Predicated region
  $region50: #{decoder_component_forward.1} parent=0 // pred_check
    _
  $region51: #{decoder_component_forward.1} parent=0 // pred_check_branch
    %980 = sbr.rel (0) target = $region53
  $region52: #{decoder_component_forward.1} parent=0 // pred_region
    _
  $region53: #{decoder_component_forward.1} parent=0 // pred_fallthru
    _
  // Predicated region
  $region54: #{decoder_component_forward.1} parent=0 // pred_check
    _
  $region55: #{decoder_component_forward.1} parent=0 // pred_check_branch
    %982 = sbr.rel (0) target = $region57
  $region56: #{decoder_component_forward.1} parent=0 // pred_region
    _
  $region57: #{decoder_component_forward.1} parent=0 // pred_fallthru
    _

</llo_original>
